<compile_context>
chip_gen: v7x
topology: tpu7x:2x2x1
jax: 0.10.0
libtpu: 0.0.40
codegen_flags: <defaults>
</compile_context>

<pallas_src>
from typing import NamedTuple, Optional

import jax
import jax.numpy as jnp
from jax.experimental import pallas as pl
from jax.experimental.pallas import tpu as pltpu


def _round_up(n: int, m: int) -> int:
    return ((n + m - 1) // m) * m


# ---------------------------------------------------------------------------
# Kernel: one grid step processes TB independent instances, each (N, D).
#   x  : (TB, N, D)    activations (f32 or bf16)
#   wa : (1, D)        attention_fc weight row (f32, zero-padded D)
#   ba : (1, 1)        attention_fc bias, SMEM scalar
#   wf : (D, OPAD)     fc weight, lane-dense padded, matmul dtype (f32/bf16)
#   bf : (1, OPAD)     fc bias (f32), pad lanes carry -1e30
#   out: (TB, N, OPAD) f32 log-probabilities
def _classifier_attn_kernel(x_ref, wa_ref, ba_ref, wf_ref, bf_ref, out_ref):
    x = x_ref[...]
    xf = x.astype(jnp.float32) if x.dtype != jnp.float32 else x

    # attention_fc: Linear(D, 1) on the VPU (mul) + XLU (lane reduce); a 1-wide
    # MXU matvec would waste >99% of the systolic array.
    scores = jnp.sum(xf * wa_ref[...], axis=-1, keepdims=True) + ba_ref[0, 0]   # (TB, N, 1)

    # softmax over the sample axis (dim=0 of each instance)
    m0 = jnp.max(scores, axis=1, keepdims=True)
    e0 = jnp.exp(scores - m0)
    att = e0 * pl.reciprocal(jnp.sum(e0, axis=1, keepdims=True), approx=False)  # (TB, N, 1)

    weighted = (xf * att).astype(wf_ref.dtype)                                  # (TB, N, D)

    # fc: one (TB*N, D) @ (D, OPAD) MXU matmul for the whole block.  N % 8 == 0
    # keeps the leading-dim collapse a free sublane view (no VMEM copy).
    tb, n, d = weighted.shape
    logits = jnp.dot(weighted.reshape(tb * n, d), wf_ref[...],
                     preferred_element_type=jnp.float32) + bf_ref[...]          # (TB*N, OPAD)

    # log_softmax over dim=1; pad lanes hold ~-1e30 so exp() underflows to 0.
    m1 = jnp.max(logits, axis=-1, keepdims=True)
    z = logits - m1
    lse = jnp.log(jnp.sum(jnp.exp(z), axis=-1, keepdims=True))
    out_ref[...] = (z - lse).reshape(tb, n, -1).astype(out_ref.dtype)


# ---------------------------------------------------------------------------
# One-time parameter preparation (outside the hot path).
class PreparedParams(NamedTuple):
    wa_row: jax.Array   # (1, DPAD)    f32
    ba: jax.Array       # (1, 1)       f32 (SMEM scalar)
    wf: jax.Array       # (DPAD, OPAD) matmul dtype
    bf: jax.Array       # (1, OPAD)    f32, pad lanes = -1e30
    in_dim: int
    out_dim: int


def prepare_params(wa, ba, wf, bf, *, matmul_dtype=jnp.float32) -> PreparedParams:
    """Pad / lay out / cast the module parameters once.

    wa: (D, 1)  ba: scalar-like  wf: (D, O)  bf: (O,)-like.
    (PyTorch nn.Linear stores (out, in); weights are passed pre-transposed to
    (in, out) so the kernel does plain x @ W.)
    """
    D = wa.shape[0]
    O = wf.shape[1]
    DPAD = _round_up(D, 128)   # lane-dense feature axis (VPU reduce + MXU K)
    OPAD = _round_up(O, 128)   # lane-dense output axis (unmasked vst)
    wa_row = jnp.pad(jnp.reshape(wa, (1, D)).astype(jnp.float32),
                     ((0, 0), (0, DPAD - D)))
    ba2 = jnp.reshape(jnp.asarray(ba, jnp.float32), (1, 1))
    wf_p = jnp.pad(wf.astype(jnp.float32),
                   ((0, DPAD - D), (0, OPAD - O))).astype(matmul_dtype)
    # -1e30 pad bias is safe in f32 (8-bit exponent); it is added after the
    # f32-accumulated matmul, never routed through a low-range dtype.
    bf_p = jnp.pad(jnp.reshape(bf, (1, O)).astype(jnp.float32),
                   ((0, 0), (0, OPAD - O)), constant_values=-1e30)
    return PreparedParams(wa_row, ba2, wf_p, bf_p, D, O)


# ---------------------------------------------------------------------------
def classifier_with_attention(x, params: PreparedParams, *,
                              instances_per_block: Optional[int] = None,
                              x_dtype=None,
                              x_buffer_count: Optional[int] = None,
                              slice_output: bool = True):
    """ClassifierWithAttention forward.

    x: (N, D) single instance, or (B, N, D) batch of independent instances
       (attention softmax is over dim=0 of each instance, as in the module).
    Returns f32 log-probabilities (N, O) / (B, N, O); with slice_output=False
    the lane-dense padded (..., OPAD) slab is returned directly, avoiding an
    extra HBM round-trip for consumers that tolerate the padded layout.
    """
    squeeze_batch = x.ndim == 2
    if squeeze_batch:
        x = x[None]
    B, N, D = x.shape
    if D != params.in_dim:
        raise ValueError(f"x feature dim {D} != prepared in_dim {params.in_dim}")
    DPAD = params.wa_row.shape[1]
    OPAD = params.wf.shape[1]
    O = params.out_dim

    # Optional bf16 activations: the kernel is HBM-bound on the x read at
    # realistic OPAD, so halving x bytes ~halves wall time (score/softmax math
    # and the matmul accumulate stay f32 in-kernel).
    if x_dtype is not None and x.dtype != x_dtype:
        x = x.astype(x_dtype)
    if DPAD != D:
        # Lane-dense feature axis.  In a real pipeline x arrives already padded
        # (done once upstream); we pad per call here only for generality.
        x = jnp.pad(x, ((0, 0), (0, 0), (0, DPAD - D)))

    # Batch TB instances per grid step so the MXU sees ~256 rows and the
    # ~0.35us/step pipeline overhead is amortized.  TB must divide B here.
    if instances_per_block is None:
        instances_per_block = max(1, pl.cdiv(256, N))
    TB = max(1, min(B, instances_per_block))
    while B % TB:
        TB -= 1

    # Explicit VMEM budget: double-buffered x/out blocks + weights + headroom.
    x_bytes = TB * N * DPAD * x.dtype.itemsize
    out_bytes = TB * N * OPAD * 4
    w_bytes = DPAD * OPAD * params.wf.dtype.itemsize + (DPAD + OPAD) * 4
    vmem_limit = int(min(max(2 * (x_bytes + out_bytes) + 2 * w_bytes + (4 << 20),
                             16 << 20), 64 << 20))

    def _spec(shape, index_map, mode):
        if mode is None:
            return pl.BlockSpec(shape, index_map)
        return pl.BlockSpec(shape, index_map, pipeline_mode=mode)

    def _call(weight_mode, x_mode):
        grid_spec = pl.GridSpec(
            grid=(B // TB,),
            in_specs=[
                _spec((TB, N, DPAD), lambda b: (b, 0, 0), x_mode),   # x block
                _spec((1, DPAD), lambda b: (0, 0), weight_mode),     # wa row
                pl.BlockSpec(memory_space=pltpu.MemorySpace.SMEM),   # ba scalar
                _spec((DPAD, OPAD), lambda b: (0, 0), weight_mode),  # wf
                _spec((1, OPAD), lambda b: (0, 0), weight_mode),     # bf
            ],
            out_specs=pl.BlockSpec((TB, N, OPAD), lambda b: (b, 0, 0)),
        )
        return pl.pallas_call(
            _classifier_attn_kernel,
            out_shape=jax.ShapeDtypeStruct((B, N, OPAD), jnp.float32),
            grid_spec=grid_spec,
            compiler_params=pltpu.CompilerParams(
                dimension_semantics=("parallel",),   # instances are independent
                vmem_limit_bytes=vmem_limit,
            ),
        )(x, params.wa_row, params.ba, params.wf, params.bf)

    try:
        # Grid-invariant weights: constant index_map => fetched once; Buffered(1)
        # frees the second VMEM buffer.  Raise x's depth (Buffered(3)) only if
        # profiling shows the x DMA exposed after batching.
        out = _call(pl.Buffered(1),
                    pl.Buffered(x_buffer_count) if x_buffer_count else None)
    except Exception:
        # Fallback for jax versions without per-BlockSpec pipeline_mode on the
        # TPU pallas_call pipeline; default double-buffering is still correct.
        out = _call(None, None)

    if slice_output and OPAD != O:
        out = out[..., :O]
    if squeeze_batch:
        out = out[0]
    return out
    # TODO(synk): for N too large for one VMEM block (esp. v7x's 64 MiB), add an
    # N-tile grid axis with a two-pass dim-0 softmax (pass 1: per-instance
    # running max/sum of scores over N tiles into scratch; pass 2: att-scaled
    # matmul + per-row log_softmax per N tile) -- a naive per-tile softmax would
    # be silently wrong.


# ---------------------------------------------------------------------------
def reference(x, wa, ba, wf, bf):
    scores = x @ wa + jnp.reshape(ba, (1, 1))
    att = jax.nn.softmax(scores, axis=0)
    weighted = x * att
    logits = weighted @ wf + jnp.reshape(bf, (1, -1))
    return jax.nn.log_softmax(logits, axis=1)


if __name__ == "__main__":
    key = jax.random.PRNGKey(0)

    def make_params(k, in_dim, out_dim):
        k_wa, k_ba, k_wf, k_bf = jax.random.split(k, 4)
        bound = 1.0 / (in_dim ** 0.5)
        wa = jax.random.uniform(k_wa, (in_dim, 1), jnp.float32, -bound, bound)
        ba = jax.random.uniform(k_ba, (1,), jnp.float32, -bound, bound)
        wf = jax.random.uniform(k_wf, (in_dim, out_dim), jnp.float32, -bound, bound)
        bf = jax.random.uniform(k_bf, (out_dim,), jnp.float32, -bound, bound)
        return wa, ba, wf, bf

    # --- Case 1: single instance, non-lane-dense dims (exercises D/O padding) ---
    N, in_dim, out_dim = 8, 32, 16
    k1, k2, k3, key = jax.random.split(key, 4)
    wa, ba, wf, bf = make_params(k1, in_dim, out_dim)
    params = prepare_params(wa, ba, wf, bf)                    # one-time prep
    x = jax.random.normal(k2, (N, in_dim), dtype=jnp.float32)
    out = jax.block_until_ready(classifier_with_attention(x, params))
    ref = reference(x, wa, ba, wf, bf)
    assert out.shape == (N, out_dim)
    assert jnp.allclose(out, ref, atol=1e-5, rtol=1e-5), "single-instance mismatch"

    # --- Case 2: batch of instances, lane-dense D (TB instances per grid step) ---
    B, N, in_dim, out_dim = 4, 8, 128, 16
    wa, ba, wf, bf = make_params(k3, in_dim, out_dim)
    params = prepare_params(wa, ba, wf, bf)
    kx, key = jax.random.split(key)
    xb = jax.random.normal(kx, (B, N, in_dim), dtype=jnp.float32)
    out_b = jax.block_until_ready(classifier_with_attention(xb, params))
    ref_b = jax.vmap(lambda xi: reference(xi, wa, ba, wf, bf))(xb)
    assert out_b.shape == (B, N, out_dim)
    assert jnp.allclose(out_b, ref_b, atol=1e-5, rtol=1e-5), "batched mismatch"

    # --- Case 3: bf16 activations + bf16 MXU path (f32 accumulate/softmax) ---
    params_bf16 = prepare_params(wa, ba, wf, bf, matmul_dtype=jnp.bfloat16)
    out_h = jax.block_until_ready(
        classifier_with_attention(xb, params_bf16, x_dtype=jnp.bfloat16))
    assert out_h.shape == (B, N, out_dim)
    assert jnp.allclose(out_h, ref_b, atol=3e-2, rtol=0.0), "bf16 path mismatch"

    print("KERNEL_OK")
</pallas_src>

<mosaic_0001>
module attributes {stable_mosaic.version = 11 : i64} {
  func.func @_classifier_attn_kernel(%arg0: i32, %arg1: memref<1x8x128xf32, #tpu.memory_space<vmem>>, %arg2: memref<1x128xf32, #tpu.memory_space<vmem>>, %arg3: memref<1x1xf32, #tpu.memory_space<smem>>, %arg4: memref<128x128xf32, #tpu.memory_space<vmem>>, %arg5: memref<1x128xf32, #tpu.memory_space<vmem>>, %arg6: memref<1x8x128xf32, #tpu.memory_space<vmem>>) attributes {dimension_semantics = [#tpu.dimension_semantics<parallel>], iteration_bounds = array<i64: 1>, scalar_prefetch = 0 : i64, scratch_operands = 0 : i64, tpu.core_type = #tpu.core_type<tc>, window_params = [{transform_indices = @transform_0, window_bounds = array<i64: 1, 8, 128>}, {pipeline_mode = #tpu.pipeline_mode<synchronous>, transform_indices = @transform_1, window_bounds = array<i64: 1, 128>}, {transform_indices = @transform_2, window_bounds = array<i64: 1, 1>}, {pipeline_mode = #tpu.pipeline_mode<synchronous>, transform_indices = @transform_3, window_bounds = array<i64: 128, 128>}, {pipeline_mode = #tpu.pipeline_mode<synchronous>, transform_indices = @transform_4, window_bounds = array<i64: 1, 128>}, {transform_indices = @transform_5, window_bounds = array<i64: 1, 8, 128>}]} {
    %c0 = arith.constant 0 : index
    %c0_0 = arith.constant 0 : index
    %c0_1 = arith.constant 0 : index
    %0 = vector.load %arg1[%c0, %c0_0, %c0_1] : memref<1x8x128xf32, #tpu.memory_space<vmem>>, vector<1x8x128xf32>
    %c0_2 = arith.constant 0 : index
    %c0_3 = arith.constant 0 : index
    %1 = vector.load %arg2[%c0_2, %c0_3] : memref<1x128xf32, #tpu.memory_space<vmem>>, vector<1x128xf32>
    %2 = vector.shape_cast %1 : vector<1x128xf32> to vector<1x1x128xf32>
    %3 = vector.broadcast %2 : vector<1x1x128xf32> to vector<1x8x128xf32>
    %4 = arith.mulf %0, %3 : vector<1x8x128xf32>
    %cst = arith.constant dense<0.000000e+00> : vector<1x8xf32>
    %5 = vector.multi_reduction <add>, %4, %cst [2] : vector<1x8x128xf32> to vector<1x8xf32>
    %6 = vector.shape_cast %5 : vector<1x8xf32> to vector<1x8x1xf32>
    %c0_4 = arith.constant 0 : index
    %c0_5 = arith.constant 0 : index
    %7 = memref.load %arg3[%c0_4, %c0_5] : memref<1x1xf32, #tpu.memory_space<smem>>
    %8 = vector.broadcast %7 : f32 to vector<1x8x1xf32>
    %9 = arith.addf %6, %8 : vector<1x8x1xf32>
    %cst_6 = arith.constant dense<0xFF800000> : vector<1x1xf32>
    %10 = vector.multi_reduction <maximumf>, %9, %cst_6 [1] : vector<1x8x1xf32> to vector<1x1xf32>
    %11 = vector.shape_cast %10 : vector<1x1xf32> to vector<1x1x1xf32>
    %12 = vector.broadcast %11 : vector<1x1x1xf32> to vector<1x8x1xf32>
    %13 = arith.subf %9, %12 : vector<1x8x1xf32>
    %14 = math.exp %13 : vector<1x8x1xf32>
    %cst_7 = arith.constant dense<0.000000e+00> : vector<1x1xf32>
    %15 = vector.multi_reduction <add>, %14, %cst_7 [1] : vector<1x8x1xf32> to vector<1x1xf32>
    %16 = vector.shape_cast %15 : vector<1x1xf32> to vector<1x1x1xf32>
    %17 = tpu.reciprocal %16 : vector<1x1x1xf32> -> vector<1x1x1xf32>
    %18 = vector.broadcast %17 : vector<1x1x1xf32> to vector<1x8x1xf32>
    %19 = arith.mulf %14, %18 : vector<1x8x1xf32>
    %20 = vector.broadcast %19 : vector<1x8x1xf32> to vector<1x8x128xf32>
    %21 = arith.mulf %0, %20 : vector<1x8x128xf32>
    %22 = vector.shape_cast %21 : vector<1x8x128xf32> to vector<8x128xf32>
    %c0_8 = arith.constant 0 : index
    %c0_9 = arith.constant 0 : index
    %23 = vector.load %arg4[%c0_8, %c0_9] : memref<128x128xf32, #tpu.memory_space<vmem>>, vector<128x128xf32>
    %cst_10 = arith.constant dense<0.000000e+00> : vector<8x128xf32>
    %24 = tpu.matmul %22, %23, %cst_10 {dimension_numbers = #tpu.dot_dimension_numbers<[1], [0], [0], [1], [0, 0, 1, 1], [], []>} : vector<8x128xf32>, vector<128x128xf32>, vector<8x128xf32> -> vector<8x128xf32>
    %c0_11 = arith.constant 0 : index
    %c0_12 = arith.constant 0 : index
    %25 = vector.load %arg5[%c0_11, %c0_12] : memref<1x128xf32, #tpu.memory_space<vmem>>, vector<1x128xf32>
    %26 = vector.broadcast %25 : vector<1x128xf32> to vector<8x128xf32>
    %27 = arith.addf %24, %26 : vector<8x128xf32>
    %cst_13 = arith.constant dense<0xFF800000> : vector<8xf32>
    %28 = vector.multi_reduction <maximumf>, %27, %cst_13 [1] : vector<8x128xf32> to vector<8xf32>
    %29 = vector.shape_cast %28 : vector<8xf32> to vector<8x1xf32>
    %30 = vector.broadcast %29 : vector<8x1xf32> to vector<8x128xf32>
    %31 = arith.subf %27, %30 : vector<8x128xf32>
    %32 = math.exp %31 : vector<8x128xf32>
    %cst_14 = arith.constant dense<0.000000e+00> : vector<8xf32>
    %33 = vector.multi_reduction <add>, %32, %cst_14 [1] : vector<8x128xf32> to vector<8xf32>
    %34 = vector.shape_cast %33 : vector<8xf32> to vector<8x1xf32>
    %35 = math.log %34 : vector<8x1xf32>
    %36 = vector.broadcast %35 : vector<8x1xf32> to vector<8x128xf32>
    %37 = arith.subf %31, %36 : vector<8x128xf32>
    %38 = vector.shape_cast %37 : vector<8x128xf32> to vector<1x8x128xf32>
    %c0_15 = arith.constant 0 : index
    %c0_16 = arith.constant 0 : index
    %c0_17 = arith.constant 0 : index
    %39 = vector.load %arg6[%c0_15, %c0_16, %c0_17] : memref<1x8x128xf32, #tpu.memory_space<vmem>>, vector<1x8x128xf32>
    tpu.vector_store %arg6[%c0_15, %c0_16, %c0_17], %38 {strides = array<i32>} : memref<1x8x128xf32, #tpu.memory_space<vmem>>, vector<1x8x128xf32>,
    return
  }
  func.func @transform_0(%arg0: i32) -> (i32, i32, i32) {
    %c0_i32 = arith.constant 0 : i32
    %c0_i32_0 = arith.constant 0 : i32
    %c0_i32_1 = arith.constant 0 : i32
    return %arg0, %c0_i32, %c0_i32_0 : i32, i32, i32
  }
  func.func @transform_1(%arg0: i32) -> (i32, i32) {
    %c0_i32 = arith.constant 0 : i32
    %c0_i32_0 = arith.constant 0 : i32
    %c0_i32_1 = arith.constant 0 : i32
    return %c0_i32, %c0_i32_0 : i32, i32
  }
  func.func @transform_2(%arg0: i32) -> (i32, i32) {
    %c0_i32 = arith.constant 0 : i32
    %c0_i32_0 = arith.constant 0 : i32
    %c0_i32_1 = arith.constant 0 : i32
    return %c0_i32, %c0_i32_0 : i32, i32
  }
  func.func @transform_3(%arg0: i32) -> (i32, i32) {
    %c0_i32 = arith.constant 0 : i32
    %c0_i32_0 = arith.constant 0 : i32
    %c0_i32_1 = arith.constant 0 : i32
    return %c0_i32, %c0_i32_0 : i32, i32
  }
  func.func @transform_4(%arg0: i32) -> (i32, i32) {
    %c0_i32 = arith.constant 0 : i32
    %c0_i32_0 = arith.constant 0 : i32
    %c0_i32_1 = arith.constant 0 : i32
    return %c0_i32, %c0_i32_0 : i32, i32
  }
  func.func @transform_5(%arg0: i32) -> (i32, i32, i32) {
    %c0_i32 = arith.constant 0 : i32
    %c0_i32_0 = arith.constant 0 : i32
    %c0_i32_1 = arith.constant 0 : i32
    return %arg0, %c0_i32, %c0_i32_0 : i32, i32, i32
  }
}

module attributes {stable_mosaic.version = 11 : i64} {
  func.func @_classifier_attn_kernel(%arg0: i32, %arg1: memref<1x8x128xf32, #tpu.memory_space<vmem>>, %arg2: memref<1x128xf32, #tpu.memory_space<vmem>>, %arg3: memref<1x1xf32, #tpu.memory_space<smem>>, %arg4: memref<128x128xf32, #tpu.memory_space<vmem>>, %arg5: memref<1x128xf32, #tpu.memory_space<vmem>>, %arg6: memref<1x8x128xf32, #tpu.memory_space<vmem>>) attributes {dimension_semantics = [#tpu.dimension_semantics<parallel>], iteration_bounds = array<i64: 1>, scalar_prefetch = 0 : i64, scratch_operands = 0 : i64, tpu.core_type = #tpu.core_type<tc>, window_params = [{transform_indices = @transform_0, window_bounds = array<i64: 1, 8, 128>}, {pipeline_mode = #tpu.pipeline_mode<synchronous>, transform_indices = @transform_1, window_bounds = array<i64: 1, 128>}, {transform_indices = @transform_2, window_bounds = array<i64: 1, 1>}, {pipeline_mode = #tpu.pipeline_mode<synchronous>, transform_indices = @transform_3, window_bounds = array<i64: 128, 128>}, {pipeline_mode = #tpu.pipeline_mode<synchronous>, transform_indices = @transform_4, window_bounds = array<i64: 1, 128>}, {transform_indices = @transform_5, window_bounds = array<i64: 1, 8, 128>}]} {
    %c0 = arith.constant 0 : index
    %c0_0 = arith.constant 0 : index
    %c0_1 = arith.constant 0 : index
    %0 = vector.load %arg1[%c0, %c0_0, %c0_1] : memref<1x8x128xf32, #tpu.memory_space<vmem>>, vector<1x8x128xf32>
    %c0_2 = arith.constant 0 : index
    %c0_3 = arith.constant 0 : index
    %1 = vector.load %arg2[%c0_2, %c0_3] : memref<1x128xf32, #tpu.memory_space<vmem>>, vector<1x128xf32>
    %2 = vector.shape_cast %1 : vector<1x128xf32> to vector<1x1x128xf32>
    %3 = vector.broadcast %2 : vector<1x1x128xf32> to vector<1x8x128xf32>
    %4 = arith.mulf %0, %3 : vector<1x8x128xf32>
    %cst = arith.constant dense<0.000000e+00> : vector<1x8xf32>
    %5 = vector.multi_reduction <add>, %4, %cst [2] : vector<1x8x128xf32> to vector<1x8xf32>
    %6 = vector.shape_cast %5 : vector<1x8xf32> to vector<1x8x1xf32>
    %c0_4 = arith.constant 0 : index
    %c0_5 = arith.constant 0 : index
    %7 = memref.load %arg3[%c0_4, %c0_5] : memref<1x1xf32, #tpu.memory_space<smem>>
    %8 = vector.broadcast %7 : f32 to vector<1x8x1xf32>
    %9 = arith.addf %6, %8 : vector<1x8x1xf32>
    %cst_6 = arith.constant dense<0xFF800000> : vector<1x1xf32>
    %10 = vector.multi_reduction <maximumf>, %9, %cst_6 [1] : vector<1x8x1xf32> to vector<1x1xf32>
    %11 = vector.shape_cast %10 : vector<1x1xf32> to vector<1x1x1xf32>
    %12 = vector.broadcast %11 : vector<1x1x1xf32> to vector<1x8x1xf32>
    %13 = arith.subf %9, %12 : vector<1x8x1xf32>
    %14 = math.exp %13 : vector<1x8x1xf32>
    %cst_7 = arith.constant dense<0.000000e+00> : vector<1x1xf32>
    %15 = vector.multi_reduction <add>, %14, %cst_7 [1] : vector<1x8x1xf32> to vector<1x1xf32>
    %16 = vector.shape_cast %15 : vector<1x1xf32> to vector<1x1x1xf32>
    %17 = tpu.reciprocal %16 : vector<1x1x1xf32> -> vector<1x1x1xf32>
    %18 = vector.broadcast %17 : vector<1x1x1xf32> to vector<1x8x1xf32>
    %19 = arith.mulf %14, %18 : vector<1x8x1xf32>
    %20 = vector.broadcast %19 : vector<1x8x1xf32> to vector<1x8x128xf32>
    %21 = arith.mulf %0, %20 : vector<1x8x128xf32>
    %22 = vector.shape_cast %21 : vector<1x8x128xf32> to vector<8x128xf32>
    %c0_8 = arith.constant 0 : index
    %c0_9 = arith.constant 0 : index
    %23 = vector.load %arg4[%c0_8, %c0_9] : memref<128x128xf32, #tpu.memory_space<vmem>>, vector<128x128xf32>
    %cst_10 = arith.constant dense<0.000000e+00> : vector<8x128xf32>
    %24 = tpu.matmul %22, %23, %cst_10 {dimension_numbers = #tpu.dot_dimension_numbers<[1], [0], [0], [1], [0, 0, 1, 1], [], []>} : vector<8x128xf32>, vector<128x128xf32>, vector<8x128xf32> -> vector<8x128xf32>
    %c0_11 = arith.constant 0 : index
    %c0_12 = arith.constant 0 : index
    %25 = vector.load %arg5[%c0_11, %c0_12] : memref<1x128xf32, #tpu.memory_space<vmem>>, vector<1x128xf32>
    %26 = vector.broadcast %25 : vector<1x128xf32> to vector<8x128xf32>
    %27 = arith.addf %24, %26 : vector<8x128xf32>
    %cst_13 = arith.constant dense<0xFF800000> : vector<8xf32>
    %28 = vector.multi_reduction <maximumf>, %27, %cst_13 [1] : vector<8x128xf32> to vector<8xf32>
    %29 = vector.shape_cast %28 : vector<8xf32> to vector<8x1xf32>
    %30 = vector.broadcast %29 : vector<8x1xf32> to vector<8x128xf32>
    %31 = arith.subf %27, %30 : vector<8x128xf32>
    %32 = math.exp %31 : vector<8x128xf32>
    %cst_14 = arith.constant dense<0.000000e+00> : vector<8xf32>
    %33 = vector.multi_reduction <add>, %32, %cst_14 [1] : vector<8x128xf32> to vector<8xf32>
    %34 = vector.shape_cast %33 : vector<8xf32> to vector<8x1xf32>
    %35 = math.log %34 : vector<8x1xf32>
    %36 = vector.broadcast %35 : vector<8x1xf32> to vector<8x128xf32>
    %37 = arith.subf %31, %36 : vector<8x128xf32>
    %38 = vector.shape_cast %37 : vector<8x128xf32> to vector<1x8x128xf32>
    %c0_15 = arith.constant 0 : index
    %c0_16 = arith.constant 0 : index
    %c0_17 = arith.constant 0 : index
    %39 = vector.load %arg6[%c0_15, %c0_16, %c0_17] : memref<1x8x128xf32, #tpu.memory_space<vmem>>, vector<1x8x128xf32>
    tpu.vector_store %arg6[%c0_15, %c0_16, %c0_17], %38 {strides = array<i32>} : memref<1x8x128xf32, #tpu.memory_space<vmem>>, vector<1x8x128xf32>,
    return
  }
  func.func @transform_0(%arg0: i32) -> (i32, i32, i32) {
    %c0_i32 = arith.constant 0 : i32
    %c0_i32_0 = arith.constant 0 : i32
    %c0_i32_1 = arith.constant 0 : i32
    return %arg0, %c0_i32, %c0_i32_0 : i32, i32, i32
  }
  func.func @transform_1(%arg0: i32) -> (i32, i32) {
    %c0_i32 = arith.constant 0 : i32
    %c0_i32_0 = arith.constant 0 : i32
    %c0_i32_1 = arith.constant 0 : i32
    return %c0_i32, %c0_i32_0 : i32, i32
  }
  func.func @transform_2(%arg0: i32) -> (i32, i32) {
    %c0_i32 = arith.constant 0 : i32
    %c0_i32_0 = arith.constant 0 : i32
    %c0_i32_1 = arith.constant 0 : i32
    return %c0_i32, %c0_i32_0 : i32, i32
  }
  func.func @transform_3(%arg0: i32) -> (i32, i32) {
    %c0_i32 = arith.constant 0 : i32
    %c0_i32_0 = arith.constant 0 : i32
    %c0_i32_1 = arith.constant 0 : i32
    return %c0_i32, %c0_i32_0 : i32, i32
  }
  func.func @transform_4(%arg0: i32) -> (i32, i32) {
    %c0_i32 = arith.constant 0 : i32
    %c0_i32_0 = arith.constant 0 : i32
    %c0_i32_1 = arith.constant 0 : i32
    return %c0_i32, %c0_i32_0 : i32, i32
  }
  func.func @transform_5(%arg0: i32) -> (i32, i32, i32) {
    %c0_i32 = arith.constant 0 : i32
    %c0_i32_0 = arith.constant 0 : i32
    %c0_i32_1 = arith.constant 0 : i32
    return %arg0, %c0_i32, %c0_i32_0 : i32, i32, i32
  }
}

</mosaic_0001>

<llo_original>
// kernel: tpu_custom_call.1
$region0: #{tpu_custom_call.1}
  #allocation0 [shape = 'u32[]', space=smem, size = 0x4, offset = 0x4, fixed_abs, tag = 'smem constant byte address 0x4 - core index']
  #allocation1 [shape = 'u32[144,128]{1,0:T(1,128)}', space=vmem, size = 0x12000, scoped, tag = 'internal scratch']
  #allocation2 [shape = 'f32[1,1]{1,0:T(1,128)S(6)}', space=smem, size = 0x200, scoped, tag = 'scoped memory for tpu_custom_call.1']
  %s0 = inlined_call_operand.hbm [shape: f32[1,8,128], index: 0, kind: input, shape index: {}]
  %s1 = inlined_call_operand.vmem [shape: f32[1,128], index: 1, kind: input, shape index: {}]
  %s2 = inlined_call_operand.<no memory space> [shape: f32[1,1], index: 2, kind: input, shape index: {}]
  %s3 = inlined_call_operand.hbm [shape: f32[128,128], index: 3, kind: input, shape index: {}]
  %s4 = inlined_call_operand.vmem [shape: f32[1,128], index: 4, kind: input, shape index: {}]
  %s5 = inlined_call_operand.hbm [shape: f32[1,8,128], index: 5, kind: output, shape index: {}]
  %s6 = sld [smem:[#allocation0]]
  $region38: #{tpu_custom_call.1} parent=0
    _
  %s8 = ssub.s32 1, %s6
  %s9 = scalar_select 0, %s8, %s6
  %10 = sst [smem:[#allocation2]] %s2
  $region1: #{tpu_custom_call.1} parent=0
    #allocation3 [shape = 'u8[4096]{0}', space=vmem, size = 0x1000, scoped, tag = 'input window, operand 0, single buffered']
    #allocation4 [shape = 's32[1]{0}', space=sflag, size = 0x4, scoped, tag = 'scoped memory for tpu_custom_call.1']
    #allocation5 [shape = 's32[1]{0}', space=sflag, size = 0x4, scoped, tag = 'scoped memory for tpu_custom_call.1']
    #allocation6 [shape = 'u8[65536]{0}', space=vmem, size = 0x10000, scoped, tag = 'input window, operand 3, single buffered']
    #allocation7 [shape = 's32[1]{0}', space=sflag, size = 0x4, scoped, tag = 'scoped memory for tpu_custom_call.1']
    #allocation8 [shape = 'u8[4096]{0}', space=vmem, size = 0x1000, scoped, tag = 'output window, operand 0, single buffered']
    %11 = vsyncpa [#allocation4], 0
    %12 = vsyncpa [#allocation7], 0
    %13 = vsyncpa [#allocation5], 0
    // Predicated region
    $region2: #{tpu_custom_call.1} parent=1 // pred_check
      _
    $region3: #{tpu_custom_call.1} parent=1 // pred_check_branch
      %15 = sbr.rel (0) target = $region5
    $region4: #{tpu_custom_call.1} parent=1 // pred_region
      %s17 = ssub.s32 128, 128
      %18 = vsyncadd [#allocation4], %s17
      %s20 = sshll.u32 [#allocation3], 4
      %s21 = int_to_ptr.vmem [resolvable:$true] %s20
      %23 = dma.hbm_to_vmem [thread:$0]  %s0, 128, %s21, [#allocation4]
    $region5: #{tpu_custom_call.1} parent=1 // pred_fallthru
      _
    // Predicated region
    $region6: #{tpu_custom_call.1} parent=1 // pred_check
      _
    $region7: #{tpu_custom_call.1} parent=1 // pred_check_branch
      %25 = sbr.rel (0) target = $region9
    $region8: #{tpu_custom_call.1} parent=1 // pred_region
      _
    $region9: #{tpu_custom_call.1} parent=1 // pred_fallthru
      _
    // Predicated region
    $region10: #{tpu_custom_call.1} parent=1 // pred_check
      _
    $region11: #{tpu_custom_call.1} parent=1 // pred_check_branch
      %27 = sbr.rel (0) target = $region13
    $region12: #{tpu_custom_call.1} parent=1 // pred_region
      _
    $region13: #{tpu_custom_call.1} parent=1 // pred_fallthru
      _
    // Predicated region
    $region14: #{tpu_custom_call.1} parent=1 // pred_check
      _
    $region15: #{tpu_custom_call.1} parent=1 // pred_check_branch
      %29 = sbr.rel (0) target = $region17
    $region16: #{tpu_custom_call.1} parent=1 // pred_region
      %s31 = ssub.s32 2048, 2048
      %32 = vsyncadd [#allocation7], %s31
      %s33 = sshll.u32 [#allocation6], 4
      %s34 = int_to_ptr.vmem [resolvable:$true] %s33
      %39 = dma.hbm_to_vmem [thread:$0]  %s3, 2048, %s34, [#allocation7], 128, 128, 8
    $region17: #{tpu_custom_call.1} parent=1 // pred_fallthru
      _
    // Predicated region
    $region18: #{tpu_custom_call.1} parent=1 // pred_check
      _
    $region19: #{tpu_custom_call.1} parent=1 // pred_check_branch
      %41 = sbr.rel (0) target = $region21
    $region20: #{tpu_custom_call.1} parent=1 // pred_region
      _
    $region21: #{tpu_custom_call.1} parent=1 // pred_fallthru
      _
    // Predicated region
    $region22: #{tpu_custom_call.1} parent=1 // pred_check
      _
    $region23: #{tpu_custom_call.1} parent=1 // pred_check_branch
      %43 = sbr.rel (0) target = $region25
    $region24: #{tpu_custom_call.1} parent=1 // pred_region
      %44 = dma.done [#allocation4], 128
    $region25: #{tpu_custom_call.1} parent=1 // pred_fallthru
      _
    // Predicated region
    $region26: #{tpu_custom_call.1} parent=1 // pred_check
      _
    $region27: #{tpu_custom_call.1} parent=1 // pred_check_branch
      %46 = sbr.rel (0) target = $region29
    $region28: #{tpu_custom_call.1} parent=1 // pred_region
      %47 = dma.done [#allocation7], 2048
    $region29: #{tpu_custom_call.1} parent=1 // pred_fallthru
      _
    %v48 = vld [vmem:[#allocation3] sm:$0xff]
    %v49 = vld [vmem:[%s1] sm:$0x1]
    %v51 = vlaneseq
    %v52 = vshrl.u32 %v51, 7
    %v53 = vsub.s32 0, %v52
    %v54 = vrot.slane %v49, %v53
    %v56 = vmul.f32 %v48, %v54
    %57 = vadd.xlane.f32.xlu0 %v56
    %v58 = vpop.xlane.xlu0 %57
    %s59 = sld [smem:[#allocation2]]
    %v60 = vstv %s59
    %v61 = vadd.f32 %v58, %v60
    %v62 = vrot.slane %v61, 4
    %v63 = vmax.f32 %v61, %v62
    %v64 = vrot.slane %v63, 2
    %v65 = vmax.f32 %v63, %v64
    %v66 = vrot.slane %v65, 1
    %v67 = vmax.f32 %v65, %v66
    %v68 = vsub.f32 %v61, %v67
    %v69 = vmul.f32 %v68, 1.442695
    %v70 = vpow.pop %v69
    %v71 = vrot.slane %v70, 4
    %v72 = vadd.f32 %v70, %v71
    %v73 = vrot.slane %v72, 2
    %v74 = vadd.f32 %v72, %v73
    %v75 = vrot.slane %v74, 1
    %v76 = vadd.f32 %v74, %v75
    %v77 = vrcp.pop %v76
    %v78 = vmul.f32 %v70, %v77
    %v79 = vmul.f32 %v48, %v78
    %v80 = vld [vmem:[#allocation6] sm:$0xff]
    %v81 = vld [vmem:[#allocation6 + $0x8] sm:$0xff]
    %v82 = vld [vmem:[#allocation6 + $0x10] sm:$0xff]
    %v83 = vld [vmem:[#allocation6 + $0x18] sm:$0xff]
    %v84 = vld [vmem:[#allocation6 + $0x20] sm:$0xff]
    %v85 = vld [vmem:[#allocation6 + $0x28] sm:$0xff]
    %v86 = vld [vmem:[#allocation6 + $0x30] sm:$0xff]
    %v87 = vld [vmem:[#allocation6 + $0x38] sm:$0xff]
    %v88 = vld [vmem:[#allocation6 + $0x40] sm:$0xff]
    %v89 = vld [vmem:[#allocation6 + $0x48] sm:$0xff]
    %v90 = vld [vmem:[#allocation6 + $0x50] sm:$0xff]
    %v91 = vld [vmem:[#allocation6 + $0x58] sm:$0xff]
    %v92 = vld [vmem:[#allocation6 + $0x60] sm:$0xff]
    %v93 = vld [vmem:[#allocation6 + $0x68] sm:$0xff]
    %v94 = vld [vmem:[#allocation6 + $0x70] sm:$0xff]
    %v95 = vld [vmem:[#allocation6 + $0x78] sm:$0xff]
    %v96 = vld [vmem:[%s4] sm:$0x1]
    %v98 = vlaneseq
    %v99 = vshrl.u32 %v98, 7
    %v100 = vsub.s32 0, %v99
    %v101 = vrot.slane %v96, %v100
    %103 = vmatprep.subr.mxu0 0.0
    %104 = vmatpush1.msra.mxu0 %v80
    %105 = vmatprep.subr.mxu0 0.0
    %106 = vmatpush1.msra.mxu0 %v81
    %107 = vmatprep.subr.mxu0 0.0
    %108 = vmatpush1.msra.mxu0 %v82
    %109 = vmatprep.subr.mxu0 0.0
    %110 = vmatpush1.msra.mxu0 %v83
    %111 = vmatprep.subr.mxu0 0.0
    %112 = vmatpush1.msra.mxu0 %v84
    %113 = vmatprep.subr.mxu0 0.0
    %114 = vmatpush1.msra.mxu0 %v85
    %115 = vmatprep.subr.mxu0 0.0
    %116 = vmatpush1.msra.mxu0 %v86
    %117 = vmatprep.subr.mxu0 0.0
    %118 = vmatpush1.msra.mxu0 %v87
    %119 = vmatprep.subr.mxu0 0.0
    %120 = vmatpush1.msra.mxu0 %v88
    %121 = vmatprep.subr.mxu0 0.0
    %122 = vmatpush1.msra.mxu0 %v89
    %123 = vmatprep.subr.mxu0 0.0
    %124 = vmatpush1.msra.mxu0 %v90
    %125 = vmatprep.subr.mxu0 0.0
    %126 = vmatpush1.msra.mxu0 %v91
    %127 = vmatprep.subr.mxu0 0.0
    %128 = vmatpush1.msra.mxu0 %v92
    %129 = vmatprep.subr.mxu0 0.0
    %130 = vmatpush1.msra.mxu0 %v93
    %131 = vmatprep.subr.mxu0 0.0
    %132 = vmatpush1.msra.mxu0 %v94
    %133 = vmatprep.subr.mxu0 0.0
    %134 = vmatpush1.msra.mxu0 %v95
    %135 = vmatprep.subr.mxu0 0.0
    %136 = vmatpush1.msra.mxu0 0.0
    %137 = vmatprep.subr.mxu0 0.0
    %138 = vmatpush1.msra.mxu0 0.0
    %139 = vmatprep.subr.mxu0 0.0
    %140 = vmatpush1.msra.mxu0 0.0
    %141 = vmatprep.subr.mxu0 0.0
    %142 = vmatpush1.msra.mxu0 0.0
    %143 = vmatprep.subr.mxu0 0.0
    %144 = vmatpush1.msra.mxu0 0.0
    %145 = vmatprep.subr.mxu0 0.0
    %146 = vmatpush1.msra.mxu0 0.0
    %147 = vmatprep.subr.mxu0 0.0
    %148 = vmatpush1.msra.mxu0 0.0
    %149 = vmatprep.subr.mxu0 0.0
    %150 = vmatpush1.msra.mxu0 0.0
    %151 = vmatprep.subr.mxu0 0.0
    %152 = vmatpush1.msra.mxu0 0.0
    %153 = vmatprep.subr.mxu0 0.0
    %154 = vmatpush1.msra.mxu0 0.0
    %155 = vmatprep.subr.mxu0 0.0
    %156 = vmatpush1.msra.mxu0 0.0
    %157 = vmatprep.subr.mxu0 0.0
    %158 = vmatpush1.msra.mxu0 0.0
    %159 = vmatprep.subr.mxu0 0.0
    %160 = vmatpush1.msra.mxu0 0.0
    %161 = vmatprep.subr.mxu0 0.0
    %162 = vmatpush1.msra.mxu0 0.0
    %163 = vmatprep.subr.mxu0 0.0
    %164 = vmatpush1.msra.mxu0 0.0
    %165 = vmatprep.subr.mxu0 0.0
    %166 = vmatpush1.msra.mxu0 0.0
    %167 = vmatprep.mubr.f32.mxu0 0.0
    %168 = vmatmul.mubr.f32.gmra.mrb[0].mxu0 %v79
    %v169 = vpop.f32.mrb[0].mxu0
    %v170 = vadd.f32 %v101, %v169
    %v171 = vpop.f32.mrb[0].mxu0
    %172 = vdwg.mxu0
    %173 = vmax.xlane.f32.xlu0 %v170
    %v174 = vpop.xlane.xlu0 %173
    %v175 = vsub.f32 %v170, %v174
    %v176 = vmul.f32 %v175, 1.442695
    %v177 = vpow.pop %v176
    %178 = vadd.xlane.f32.xlu0 %v177
    %v179 = vpop.xlane.xlu0 %178
    %v180 = vlog2.pop %v179
    %v181 = vmul.f32 %v180, 0.6931472
    %v182 = vsub.f32 %v175, %v181
    %183 = vst [vmem:[#allocation8] sm:$0xff] %v182
    // Predicated region
    $region30: #{tpu_custom_call.1} parent=1 // pred_check
      _
    $region31: #{tpu_custom_call.1} parent=1 // pred_check_branch
      %185 = sbr.rel (0) target = $region33
    $region32: #{tpu_custom_call.1} parent=1 // pred_region
      %s187 = ssub.s32 128, 128
      %188 = vsyncadd [#allocation5], %s187
      %s190 = sshll.u32 [#allocation8], 4
      %s191 = int_to_ptr.vmem [resolvable:$true] %s190
      %193 = dma.vmem_to_hbm [thread:$0]  %s191, 128, %s5, [#allocation5]
    $region33: #{tpu_custom_call.1} parent=1 // pred_fallthru
      _
    // Predicated region
    $region34: #{tpu_custom_call.1} parent=1 // pred_check
      _
    $region35: #{tpu_custom_call.1} parent=1 // pred_check_branch
      %195 = sbr.rel (0) target = $region37
    $region36: #{tpu_custom_call.1} parent=1 // pred_region
      %196 = dma.done [#allocation5], 128
    $region37: #{tpu_custom_call.1} parent=1 // pred_fallthru
      _
    %197 = vsyncpa [#allocation4], 1
    %198 = vsyncpa [#allocation7], 1
    %199 = vsyncpa [#allocation5], 1

// kernel: tpu_custom_call.1
$region0: #{tpu_custom_call.1}
  #allocation0 [shape = 'u32[]', space=smem, size = 0x4, offset = 0x4, fixed_abs, tag = 'smem constant byte address 0x4 - core index']
  #allocation1 [shape = 'u32[144,128]{1,0:T(1,128)}', space=vmem, size = 0x12000, scoped, tag = 'internal scratch']
  #allocation2 [shape = 'f32[1,1]{1,0:T(1,128)S(6)}', space=smem, size = 0x200, scoped, tag = 'scoped memory for tpu_custom_call.1']
  %s0 = inlined_call_operand.hbm [shape: f32[1,8,128], index: 0, kind: input, shape index: {}]
  %s1 = inlined_call_operand.vmem [shape: f32[1,128], index: 1, kind: input, shape index: {}]
  %s2 = inlined_call_operand.<no memory space> [shape: f32[1,1], index: 2, kind: input, shape index: {}]
  %s3 = inlined_call_operand.hbm [shape: f32[128,128], index: 3, kind: input, shape index: {}]
  %s4 = inlined_call_operand.vmem [shape: f32[1,128], index: 4, kind: input, shape index: {}]
  %s5 = inlined_call_operand.hbm [shape: f32[1,8,128], index: 5, kind: output, shape index: {}]
  %s6 = sld [smem:[#allocation0]]
  $region38: #{tpu_custom_call.1} parent=0
    _
  %s8 = ssub.s32 1, %s6
  %s9 = scalar_select 0, %s8, %s6
  %10 = sst [smem:[#allocation2]] %s2
  $region1: #{tpu_custom_call.1} parent=0
    #allocation3 [shape = 'u8[4096]{0}', space=vmem, size = 0x1000, scoped, tag = 'input window, operand 0, single buffered']
    #allocation4 [shape = 's32[1]{0}', space=sflag, size = 0x4, scoped, tag = 'scoped memory for tpu_custom_call.1']
    #allocation5 [shape = 's32[1]{0}', space=sflag, size = 0x4, scoped, tag = 'scoped memory for tpu_custom_call.1']
    #allocation6 [shape = 'u8[65536]{0}', space=vmem, size = 0x10000, scoped, tag = 'input window, operand 3, single buffered']
    #allocation7 [shape = 's32[1]{0}', space=sflag, size = 0x4, scoped, tag = 'scoped memory for tpu_custom_call.1']
    #allocation8 [shape = 'u8[4096]{0}', space=vmem, size = 0x1000, scoped, tag = 'output window, operand 0, single buffered']
    %11 = vsyncpa [#allocation4], 0
    %12 = vsyncpa [#allocation7], 0
    %13 = vsyncpa [#allocation5], 0
    // Predicated region
    $region2: #{tpu_custom_call.1} parent=1 // pred_check
      _
    $region3: #{tpu_custom_call.1} parent=1 // pred_check_branch
      %15 = sbr.rel (0) target = $region5
    $region4: #{tpu_custom_call.1} parent=1 // pred_region
      %s17 = ssub.s32 128, 128
      %18 = vsyncadd [#allocation4], %s17
      %s20 = sshll.u32 [#allocation3], 4
      %s21 = int_to_ptr.vmem [resolvable:$true] %s20
      %23 = dma.hbm_to_vmem [thread:$0]  %s0, 128, %s21, [#allocation4]
    $region5: #{tpu_custom_call.1} parent=1 // pred_fallthru
      _
    // Predicated region
    $region6: #{tpu_custom_call.1} parent=1 // pred_check
      _
    $region7: #{tpu_custom_call.1} parent=1 // pred_check_branch
      %25 = sbr.rel (0) target = $region9
    $region8: #{tpu_custom_call.1} parent=1 // pred_region
      _
    $region9: #{tpu_custom_call.1} parent=1 // pred_fallthru
      _
    // Predicated region
    $region10: #{tpu_custom_call.1} parent=1 // pred_check
      _
    $region11: #{tpu_custom_call.1} parent=1 // pred_check_branch
      %27 = sbr.rel (0) target = $region13
    $region12: #{tpu_custom_call.1} parent=1 // pred_region
      _
    $region13: #{tpu_custom_call.1} parent=1 // pred_fallthru
      _
    // Predicated region
    $region14: #{tpu_custom_call.1} parent=1 // pred_check
      _
    $region15: #{tpu_custom_call.1} parent=1 // pred_check_branch
      %29 = sbr.rel (0) target = $region17
    $region16: #{tpu_custom_call.1} parent=1 // pred_region
      %s31 = ssub.s32 2048, 2048
      %32 = vsyncadd [#allocation7], %s31
      %s33 = sshll.u32 [#allocation6], 4
      %s34 = int_to_ptr.vmem [resolvable:$true] %s33
      %39 = dma.hbm_to_vmem [thread:$0]  %s3, 2048, %s34, [#allocation7], 128, 128, 8
    $region17: #{tpu_custom_call.1} parent=1 // pred_fallthru
      _
    // Predicated region
    $region18: #{tpu_custom_call.1} parent=1 // pred_check
      _
    $region19: #{tpu_custom_call.1} parent=1 // pred_check_branch
      %41 = sbr.rel (0) target = $region21
    $region20: #{tpu_custom_call.1} parent=1 // pred_region
      _
    $region21: #{tpu_custom_call.1} parent=1 // pred_fallthru
      _
    // Predicated region
    $region22: #{tpu_custom_call.1} parent=1 // pred_check
      _
    $region23: #{tpu_custom_call.1} parent=1 // pred_check_branch
      %43 = sbr.rel (0) target = $region25
    $region24: #{tpu_custom_call.1} parent=1 // pred_region
      %44 = dma.done [#allocation4], 128
    $region25: #{tpu_custom_call.1} parent=1 // pred_fallthru
      _
    // Predicated region
    $region26: #{tpu_custom_call.1} parent=1 // pred_check
      _
    $region27: #{tpu_custom_call.1} parent=1 // pred_check_branch
      %46 = sbr.rel (0) target = $region29
    $region28: #{tpu_custom_call.1} parent=1 // pred_region
      %47 = dma.done [#allocation7], 2048
    $region29: #{tpu_custom_call.1} parent=1 // pred_fallthru
      _
    %v48 = vld [vmem:[#allocation3] sm:$0xff]
    %v49 = vld [vmem:[%s1] sm:$0x1]
    %v51 = vlaneseq
    %v52 = vshrl.u32 %v51, 7
    %v53 = vsub.s32 0, %v52
    %v54 = vrot.slane %v49, %v53
    %v56 = vmul.f32 %v48, %v54
    %57 = vadd.xlane.f32.xlu0 %v56
    %v58 = vpop.xlane.xlu0 %57
    %s59 = sld [smem:[#allocation2]]
    %v60 = vstv %s59
    %v61 = vadd.f32 %v58, %v60
    %v62 = vrot.slane %v61, 4
    %v63 = vmax.f32 %v61, %v62
    %v64 = vrot.slane %v63, 2
    %v65 = vmax.f32 %v63, %v64
    %v66 = vrot.slane %v65, 1
    %v67 = vmax.f32 %v65, %v66
    %v68 = vsub.f32 %v61, %v67
    %v69 = vmul.f32 %v68, 1.442695
    %v70 = vpow.pop %v69
    %v71 = vrot.slane %v70, 4
    %v72 = vadd.f32 %v70, %v71
    %v73 = vrot.slane %v72, 2
    %v74 = vadd.f32 %v72, %v73
    %v75 = vrot.slane %v74, 1
    %v76 = vadd.f32 %v74, %v75
    %v77 = vrcp.pop %v76
    %v78 = vmul.f32 %v70, %v77
    %v79 = vmul.f32 %v48, %v78
    %v80 = vld [vmem:[#allocation6] sm:$0xff]
    %v81 = vld [vmem:[#allocation6 + $0x8] sm:$0xff]
    %v82 = vld [vmem:[#allocation6 + $0x10] sm:$0xff]
    %v83 = vld [vmem:[#allocation6 + $0x18] sm:$0xff]
    %v84 = vld [vmem:[#allocation6 + $0x20] sm:$0xff]
    %v85 = vld [vmem:[#allocation6 + $0x28] sm:$0xff]
    %v86 = vld [vmem:[#allocation6 + $0x30] sm:$0xff]
    %v87 = vld [vmem:[#allocation6 + $0x38] sm:$0xff]
    %v88 = vld [vmem:[#allocation6 + $0x40] sm:$0xff]
    %v89 = vld [vmem:[#allocation6 + $0x48] sm:$0xff]
    %v90 = vld [vmem:[#allocation6 + $0x50] sm:$0xff]
    %v91 = vld [vmem:[#allocation6 + $0x58] sm:$0xff]
    %v92 = vld [vmem:[#allocation6 + $0x60] sm:$0xff]
    %v93 = vld [vmem:[#allocation6 + $0x68] sm:$0xff]
    %v94 = vld [vmem:[#allocation6 + $0x70] sm:$0xff]
    %v95 = vld [vmem:[#allocation6 + $0x78] sm:$0xff]
    %v96 = vld [vmem:[%s4] sm:$0x1]
    %v98 = vlaneseq
    %v99 = vshrl.u32 %v98, 7
    %v100 = vsub.s32 0, %v99
    %v101 = vrot.slane %v96, %v100
    %103 = vmatprep.subr.mxu0 0.0
    %104 = vmatpush1.msra.mxu0 %v80
    %105 = vmatprep.subr.mxu0 0.0
    %106 = vmatpush1.msra.mxu0 %v81
    %107 = vmatprep.subr.mxu0 0.0
    %108 = vmatpush1.msra.mxu0 %v82
    %109 = vmatprep.subr.mxu0 0.0
    %110 = vmatpush1.msra.mxu0 %v83
    %111 = vmatprep.subr.mxu0 0.0
    %112 = vmatpush1.msra.mxu0 %v84
    %113 = vmatprep.subr.mxu0 0.0
    %114 = vmatpush1.msra.mxu0 %v85
    %115 = vmatprep.subr.mxu0 0.0
    %116 = vmatpush1.msra.mxu0 %v86
    %117 = vmatprep.subr.mxu0 0.0
    %118 = vmatpush1.msra.mxu0 %v87
    %119 = vmatprep.subr.mxu0 0.0
    %120 = vmatpush1.msra.mxu0 %v88
    %121 = vmatprep.subr.mxu0 0.0
    %122 = vmatpush1.msra.mxu0 %v89
    %123 = vmatprep.subr.mxu0 0.0
    %124 = vmatpush1.msra.mxu0 %v90
    %125 = vmatprep.subr.mxu0 0.0
    %126 = vmatpush1.msra.mxu0 %v91
    %127 = vmatprep.subr.mxu0 0.0
    %128 = vmatpush1.msra.mxu0 %v92
    %129 = vmatprep.subr.mxu0 0.0
    %130 = vmatpush1.msra.mxu0 %v93
    %131 = vmatprep.subr.mxu0 0.0
    %132 = vmatpush1.msra.mxu0 %v94
    %133 = vmatprep.subr.mxu0 0.0
    %134 = vmatpush1.msra.mxu0 %v95
    %135 = vmatprep.subr.mxu0 0.0
    %136 = vmatpush1.msra.mxu0 0.0
    %137 = vmatprep.subr.mxu0 0.0
    %138 = vmatpush1.msra.mxu0 0.0
    %139 = vmatprep.subr.mxu0 0.0
    %140 = vmatpush1.msra.mxu0 0.0
    %141 = vmatprep.subr.mxu0 0.0
    %142 = vmatpush1.msra.mxu0 0.0
    %143 = vmatprep.subr.mxu0 0.0
    %144 = vmatpush1.msra.mxu0 0.0
    %145 = vmatprep.subr.mxu0 0.0
    %146 = vmatpush1.msra.mxu0 0.0
    %147 = vmatprep.subr.mxu0 0.0
    %148 = vmatpush1.msra.mxu0 0.0
    %149 = vmatprep.subr.mxu0 0.0
    %150 = vmatpush1.msra.mxu0 0.0
    %151 = vmatprep.subr.mxu0 0.0
    %152 = vmatpush1.msra.mxu0 0.0
    %153 = vmatprep.subr.mxu0 0.0
    %154 = vmatpush1.msra.mxu0 0.0
    %155 = vmatprep.subr.mxu0 0.0
    %156 = vmatpush1.msra.mxu0 0.0
    %157 = vmatprep.subr.mxu0 0.0
    %158 = vmatpush1.msra.mxu0 0.0
    %159 = vmatprep.subr.mxu0 0.0
    %160 = vmatpush1.msra.mxu0 0.0
    %161 = vmatprep.subr.mxu0 0.0
    %162 = vmatpush1.msra.mxu0 0.0
    %163 = vmatprep.subr.mxu0 0.0
    %164 = vmatpush1.msra.mxu0 0.0
    %165 = vmatprep.subr.mxu0 0.0
    %166 = vmatpush1.msra.mxu0 0.0
    %167 = vmatprep.mubr.f32.mxu0 0.0
    %168 = vmatmul.mubr.f32.gmra.mrb[0].mxu0 %v79
    %v169 = vpop.f32.mrb[0].mxu0
    %v170 = vadd.f32 %v101, %v169
    %v171 = vpop.f32.mrb[0].mxu0
    %172 = vdwg.mxu0
    %173 = vmax.xlane.f32.xlu0 %v170
    %v174 = vpop.xlane.xlu0 %173
    %v175 = vsub.f32 %v170, %v174
    %v176 = vmul.f32 %v175, 1.442695
    %v177 = vpow.pop %v176
    %178 = vadd.xlane.f32.xlu0 %v177
    %v179 = vpop.xlane.xlu0 %178
    %v180 = vlog2.pop %v179
    %v181 = vmul.f32 %v180, 0.6931472
    %v182 = vsub.f32 %v175, %v181
    %183 = vst [vmem:[#allocation8] sm:$0xff] %v182
    // Predicated region
    $region30: #{tpu_custom_call.1} parent=1 // pred_check
      _
    $region31: #{tpu_custom_call.1} parent=1 // pred_check_branch
      %185 = sbr.rel (0) target = $region33
    $region32: #{tpu_custom_call.1} parent=1 // pred_region
      %s187 = ssub.s32 128, 128
      %188 = vsyncadd [#allocation5], %s187
      %s190 = sshll.u32 [#allocation8], 4
      %s191 = int_to_ptr.vmem [resolvable:$true] %s190
      %193 = dma.vmem_to_hbm [thread:$0]  %s191, 128, %s5, [#allocation5]
    $region33: #{tpu_custom_call.1} parent=1 // pred_fallthru
      _
    // Predicated region
    $region34: #{tpu_custom_call.1} parent=1 // pred_check
      _
    $region35: #{tpu_custom_call.1} parent=1 // pred_check_branch
      %195 = sbr.rel (0) target = $region37
    $region36: #{tpu_custom_call.1} parent=1 // pred_region
      %196 = dma.done [#allocation5], 128
    $region37: #{tpu_custom_call.1} parent=1 // pred_fallthru
      _
    %197 = vsyncpa [#allocation4], 1
    %198 = vsyncpa [#allocation7], 1
    %199 = vsyncpa [#allocation5], 1

</llo_original>
